<compile_context>
chip_gen: v5e
topology: v5e:2x2
jax: 0.10.0
libtpu: 0.0.40
codegen_flags: <defaults>
</compile_context>

<pallas_src>
import jax
import jax.numpy as jnp
from jax.experimental import pallas as pl
from jax.experimental.pallas import tpu as pltpu


IN_DIM = 2          # state dim
HID = 50            # hidden units
OUT_DIM = 2         # action values
LANES = 128         # padded lane width

# Packed-parameter row layout (144 x 128 f32, ~72 KiB):
#   rows [0, 2)    : w1_t  (2, 50)  zero-padded to (2, 128)
#   row   2        : b1    (50,)    zero-padded to 128 lanes
#   rows [8, 136)  : w2_t  (50, 2)  zero-padded to (128, 128)   (K and N padded)
#   row   136      : b2    (2,)     zero-padded to 128 lanes
_W1_ROW = 0
_B1_ROW = 2
_W2_ROW = 8
_B2_ROW = _W2_ROW + LANES          # 136
_P_ROWS = 144                      # multiple of 8


def dqn_kernel(x_ref, p_ref, o_ref):
    x = x_ref[...]                                   # (TB, 2)   f32
    w1 = p_ref[_W1_ROW:_W1_ROW + IN_DIM, :]          # (2, 128)
    b1 = p_ref[_B1_ROW:_B1_ROW + 1, :]               # (1, 128)
    w2 = p_ref[_W2_ROW:_W2_ROW + LANES, :]           # (128, 128)
    b2 = p_ref[_B2_ROW:_B2_ROW + 1, :]               # (1, 128)

    # Layer 1 on the VPU: K=2 is far too small for the MXU, two FMAs suffice.
    # Padded lanes (>= 50) of w1/b1 are zero, so h is zero there after ReLU.
    h = x[:, 0:1] * w1[0:1, :] + x[:, 1:2] * w1[1:2, :] + b1     # (TB, 128)
    h = jnp.maximum(h, 0.0)

    # Layer 2 on the MXU: lane-dense (TB,128) @ (128,128); padded rows/cols of
    # w2 are zero so they contribute nothing.
    y = jnp.dot(h, w2, preferred_element_type=jnp.float32) + b2  # (TB, 128)
    o_ref[...] = y.astype(o_ref.dtype)


def _round_up(n, m):
    return ((n + m - 1) // m) * m


def pack_params(w1_t, b1, w2_t, b2):
    """Pack (2,50) w1_t, (50,) b1, (50,2) w2_t, (2,) b2 into one (144,128) f32."""
    p = jnp.zeros((_P_ROWS, LANES), jnp.float32)
    p = p.at[_W1_ROW:_W1_ROW + IN_DIM, :HID].set(w1_t.astype(jnp.float32))
    p = p.at[_B1_ROW, :HID].set(b1.reshape(-1).astype(jnp.float32))
    p = p.at[_W2_ROW:_W2_ROW + HID, :OUT_DIM].set(w2_t.astype(jnp.float32))
    p = p.at[_B2_ROW, :OUT_DIM].set(b2.reshape(-1).astype(jnp.float32))
    return p


def dqn_forward(x, params_packed, *, tb=512):
    """y = relu(x @ W1.T + b1) @ W2.T + b2 ; x: (B, 2) f32 -> (B, 2) f32."""
    B = x.shape[0]
    x = x.astype(jnp.float32)

    # Batch tile: multiple of 8 sublanes, capped at `tb` (small enough for the
    # 32 MiB default scoped VMEM on all of v5e/v6e/v7x).
    TB = min(tb, _round_up(max(B, 1), 8))
    B_pad = _round_up(B, TB)
    if B_pad != B:
        x = jnp.pad(x, ((0, B_pad - B), (0, 0)))
    nb = B_pad // TB

    cost = pl.CostEstimate(
        flops=2 * B_pad * (IN_DIM * HID + HID * OUT_DIM),
        transcendentals=0,
        bytes_accessed=B_pad * (IN_DIM + LANES) * 4 + params_packed.size * 4,
    )

    out = pl.pallas_call(
        dqn_kernel,
        out_shape=jax.ShapeDtypeStruct((B_pad, LANES), jnp.float32),
        grid=(nb,),
        in_specs=[
            pl.BlockSpec((TB, IN_DIM), lambda i: (i, 0)),      # x: tiled over batch
            pl.BlockSpec((_P_ROWS, LANES), lambda i: (0, 0)),  # params: resident
        ],
        out_specs=pl.BlockSpec((TB, LANES), lambda i: (i, 0)),  # lane-dense output
        compiler_params=pltpu.CompilerParams(
            dimension_semantics=("parallel",),   # shards batch tiles across TCs (v7x)
            vmem_limit_bytes=32 * 1024 * 1024,
        ),
        cost_estimate=cost,
    )(x, params_packed)

    return out[:B, :OUT_DIM]


def init_params(key):
    # Deterministic init mimicking nn.Linear default: U(-1/sqrt(fan_in), ...).
    k1, k2, k3, k4 = jax.random.split(key, 4)
    lim1 = 1.0 / jnp.sqrt(IN_DIM)
    lim2 = 1.0 / jnp.sqrt(HID)
    # Stored as (in, out) == PyTorch weight transposed.
    w1_t = jax.random.uniform(k1, (IN_DIM, HID), jnp.float32, -lim1, lim1)
    b1 = jax.random.uniform(k2, (HID,), jnp.float32, -lim1, lim1)
    w2_t = jax.random.uniform(k3, (HID, OUT_DIM), jnp.float32, -lim2, lim2)
    b2 = jax.random.uniform(k4, (OUT_DIM,), jnp.float32, -lim2, lim2)
    return w1_t, b1, w2_t, b2


def _reference(x, w1_t, b1, w2_t, b2):
    return jnp.maximum(x @ w1_t + b1, 0.0) @ w2_t + b2


if __name__ == "__main__":
    key = jax.random.PRNGKey(0)
    kx, kx2, kp = jax.random.split(key, 3)

    w1_t, b1, w2_t, b2 = init_params(kp)
    params = pack_params(w1_t, b1, w2_t, b2)

    # Small RL-style batch of 2-dim states (single grid step).
    B = 8
    x = jax.random.normal(kx, (B, IN_DIM), jnp.float32)
    out = jax.block_until_ready(dqn_forward(x, params))
    ref = _reference(x, w1_t, b1, w2_t, b2)
    assert out.shape == (B, OUT_DIM)
    assert jnp.allclose(out, ref, atol=1e-5, rtol=1e-5)

    # Larger batch exercising the tiled (multi-step) grid path.
    B2 = 70  # not a multiple of the tile -> tests batch padding + slicing
    x2 = jax.random.normal(kx2, (B2, IN_DIM), jnp.float32)
    out2 = jax.block_until_ready(dqn_forward(x2, params, tb=16))
    ref2 = _reference(x2, w1_t, b1, w2_t, b2)
    assert out2.shape == (B2, OUT_DIM)
    assert jnp.allclose(out2, ref2, atol=1e-5, rtol=1e-5)

    print("KERNEL_OK")
</pallas_src>

<mosaic_0001>
module attributes {stable_mosaic.version = 11 : i64} {
  func.func @dqn_kernel(%arg0: i32, %arg1: memref<8x2xf32, #tpu.memory_space<vmem>>, %arg2: memref<144x128xf32, #tpu.memory_space<vmem>>, %arg3: memref<8x128xf32, #tpu.memory_space<vmem>>) attributes {dimension_semantics = [#tpu.dimension_semantics<parallel>], iteration_bounds = array<i64: 1>, scalar_prefetch = 0 : i64, scratch_operands = 0 : i64, tpu.core_type = #tpu.core_type<tc>, window_params = [{transform_indices = @transform_0, window_bounds = array<i64: 8, 2>}, {pipeline_mode = #tpu.pipeline_mode<synchronous>, transform_indices = @transform_1, window_bounds = array<i64: 144, 128>}, {transform_indices = @transform_2, window_bounds = array<i64: 8, 128>}]} {
    %c0 = arith.constant 0 : index
    %c0_0 = arith.constant 0 : index
    %0 = vector.load %arg1[%c0, %c0_0] : memref<8x2xf32, #tpu.memory_space<vmem>>, vector<8x2xf32>
    %c0_1 = arith.constant 0 : index
    %c0_2 = arith.constant 0 : index
    %1 = vector.load %arg2[%c0_1, %c0_2] : memref<144x128xf32, #tpu.memory_space<vmem>>, vector<2x128xf32>
    %c2 = arith.constant 2 : index
    %c0_3 = arith.constant 0 : index
    %2 = vector.load %arg2[%c2, %c0_3] : memref<144x128xf32, #tpu.memory_space<vmem>>, vector<1x128xf32>
    %c8 = arith.constant 8 : index
    %c0_4 = arith.constant 0 : index
    %3 = vector.load %arg2[%c8, %c0_4] : memref<144x128xf32, #tpu.memory_space<vmem>>, vector<128x128xf32>
    %c136 = arith.constant 136 : index
    %c0_5 = arith.constant 0 : index
    %4 = vector.load %arg2[%c136, %c0_5] : memref<144x128xf32, #tpu.memory_space<vmem>>, vector<1x128xf32>
    %5 = vector.extract_strided_slice %0 {offsets = [0, 0], sizes = [8, 1], strides = [1, 1]} : vector<8x2xf32> to vector<8x1xf32>
    %6 = vector.extract_strided_slice %1 {offsets = [0, 0], sizes = [1, 128], strides = [1, 1]} : vector<2x128xf32> to vector<1x128xf32>
    %7 = vector.broadcast %5 : vector<8x1xf32> to vector<8x128xf32>
    %8 = vector.broadcast %6 : vector<1x128xf32> to vector<8x128xf32>
    %9 = arith.mulf %7, %8 : vector<8x128xf32>
    %10 = vector.extract_strided_slice %0 {offsets = [0, 1], sizes = [8, 1], strides = [1, 1]} : vector<8x2xf32> to vector<8x1xf32>
    %11 = vector.extract_strided_slice %1 {offsets = [1, 0], sizes = [1, 128], strides = [1, 1]} : vector<2x128xf32> to vector<1x128xf32>
    %12 = vector.broadcast %10 : vector<8x1xf32> to vector<8x128xf32>
    %13 = vector.broadcast %11 : vector<1x128xf32> to vector<8x128xf32>
    %14 = arith.mulf %12, %13 : vector<8x128xf32>
    %15 = arith.addf %9, %14 : vector<8x128xf32>
    %16 = vector.broadcast %2 : vector<1x128xf32> to vector<8x128xf32>
    %17 = arith.addf %15, %16 : vector<8x128xf32>
    %cst = arith.constant 0.000000e+00 : f32
    %18 = vector.broadcast %cst : f32 to vector<8x128xf32>
    %19 = arith.maximumf %17, %18 : vector<8x128xf32>
    %cst_6 = arith.constant dense<0.000000e+00> : vector<8x128xf32>
    %20 = tpu.matmul %19, %3, %cst_6 {dimension_numbers = #tpu.dot_dimension_numbers<[1], [0], [0], [1], [0, 0, 1, 1], [], []>} : vector<8x128xf32>, vector<128x128xf32>, vector<8x128xf32> -> vector<8x128xf32>
    %21 = vector.broadcast %4 : vector<1x128xf32> to vector<8x128xf32>
    %22 = arith.addf %20, %21 : vector<8x128xf32>
    %c0_7 = arith.constant 0 : index
    %c0_8 = arith.constant 0 : index
    %23 = vector.load %arg3[%c0_7, %c0_8] : memref<8x128xf32, #tpu.memory_space<vmem>>, vector<8x128xf32>
    tpu.vector_store %arg3[%c0_7, %c0_8], %22 {strides = array<i32>} : memref<8x128xf32, #tpu.memory_space<vmem>>, vector<8x128xf32>,
    return
  }
  func.func @transform_0(%arg0: i32) -> (i32, i32) {
    %c0_i32 = arith.constant 0 : i32
    %c0_i32_0 = arith.constant 0 : i32
    return %arg0, %c0_i32 : i32, i32
  }
  func.func @transform_1(%arg0: i32) -> (i32, i32) {
    %c0_i32 = arith.constant 0 : i32
    %c0_i32_0 = arith.constant 0 : i32
    %c0_i32_1 = arith.constant 0 : i32
    return %c0_i32, %c0_i32_0 : i32, i32
  }
  func.func @transform_2(%arg0: i32) -> (i32, i32) {
    %c0_i32 = arith.constant 0 : i32
    %c0_i32_0 = arith.constant 0 : i32
    return %arg0, %c0_i32 : i32, i32
  }
}

</mosaic_0001>

<llo_original>
// kernel: tpu_custom_call.1
$region0: #{tpu_custom_call.1}
  #allocation0 [shape = 'u32[]', space=smem, size = 0x4, offset = 0x4, fixed_abs, tag = 'smem constant byte address 0x4 - core index']
  #allocation1 [shape = 'u32[72,128]{1,0:T(1,128)}', space=vmem, size = 0x9000, scoped, tag = 'internal scratch']
  %s0 = inlined_call_operand.vmem [shape: f32[8,2], index: 0, kind: input, shape index: {}]
  %s1 = inlined_call_operand.hbm [shape: f32[144,128], index: 1, kind: input, shape index: {}]
  %s2 = inlined_call_operand.hbm [shape: f32[8,128], index: 2, kind: output, shape index: {}]
  %s3 = sld [smem:[#allocation0]]
  $region22: #{tpu_custom_call.1} parent=0
    _
  %s5 = ssub.s32 1, %s3
  %s6 = scalar_select 0, %s5, %s3
  $region1: #{tpu_custom_call.1} parent=0
    #allocation2 [shape = 'u8[73728]{0}', space=vmem, size = 0x12000, scoped, tag = 'input window, operand 1, single buffered']
    #allocation3 [shape = 's32[1]{0}', space=sflag, size = 0x4, scoped, tag = 'scoped memory for tpu_custom_call.1']
    #allocation4 [shape = 's32[1]{0}', space=sflag, size = 0x4, scoped, tag = 'scoped memory for tpu_custom_call.1']
    #allocation5 [shape = 'u8[4096]{0}', space=vmem, size = 0x1000, scoped, tag = 'output window, operand 0, single buffered']
    %7 = vsyncpa [#allocation3], 0
    %8 = vsyncpa [#allocation4], 0
    // Predicated region
    $region2: #{tpu_custom_call.1} parent=1 // pred_check
      _
    $region3: #{tpu_custom_call.1} parent=1 // pred_check_branch
      %10 = sbr.rel (0) target = $region5
    $region4: #{tpu_custom_call.1} parent=1 // pred_region
      _
    $region5: #{tpu_custom_call.1} parent=1 // pred_fallthru
      _
    // Predicated region
    $region6: #{tpu_custom_call.1} parent=1 // pred_check
      _
    $region7: #{tpu_custom_call.1} parent=1 // pred_check_branch
      %12 = sbr.rel (0) target = $region9
    $region8: #{tpu_custom_call.1} parent=1 // pred_region
      %14 = vsyncadd [#allocation3], 0
      %s15 = sshll.u32 %s1, 4
      %s16 = int_to_ptr.hbm [resolvable:$true] %s15
      %s17 = sshll.u32 [#allocation2], 4
      %s18 = int_to_ptr.vmem [resolvable:$true] %s17
      %23 = dma.hbm_to_vmem [thread:$0]  %s16, 2304, %s18, [#allocation3], 128, 128, 8
    $region9: #{tpu_custom_call.1} parent=1 // pred_fallthru
      _
    // Predicated region
    $region10: #{tpu_custom_call.1} parent=1 // pred_check
      _
    $region11: #{tpu_custom_call.1} parent=1 // pred_check_branch
      %25 = sbr.rel (0) target = $region13
    $region12: #{tpu_custom_call.1} parent=1 // pred_region
      %27 = dma.done [#allocation3], 2304
    $region13: #{tpu_custom_call.1} parent=1 // pred_fallthru
      _
    %v28 = vld [vmem:[%s0] sm:$0xff]
    %v29 = vld [vmem:[#allocation2] sm:$0x3]
    %v30 = vld [vmem:[#allocation2 + $0x2] sm:$0x1]
    %v31 = vld [vmem:[#allocation2 + $0x8] sm:$0xff]
    %v32 = vld [vmem:[#allocation2 + $0x10] sm:$0xff]
    %v33 = vld [vmem:[#allocation2 + $0x18] sm:$0xff]
    %v34 = vld [vmem:[#allocation2 + $0x20] sm:$0xff]
    %v35 = vld [vmem:[#allocation2 + $0x28] sm:$0xff]
    %v36 = vld [vmem:[#allocation2 + $0x30] sm:$0xff]
    %v37 = vld [vmem:[#allocation2 + $0x38] sm:$0xff]
    %v38 = vld [vmem:[#allocation2 + $0x40] sm:$0xff]
    %v39 = vld [vmem:[#allocation2 + $0x48] sm:$0xff]
    %v40 = vld [vmem:[#allocation2 + $0x50] sm:$0xff]
    %v41 = vld [vmem:[#allocation2 + $0x58] sm:$0xff]
    %v42 = vld [vmem:[#allocation2 + $0x60] sm:$0xff]
    %v43 = vld [vmem:[#allocation2 + $0x68] sm:$0xff]
    %v44 = vld [vmem:[#allocation2 + $0x70] sm:$0xff]
    %v45 = vld [vmem:[#allocation2 + $0x78] sm:$0xff]
    %v46 = vld [vmem:[#allocation2 + $0x80] sm:$0xff]
    %v47 = vld [vmem:[#allocation2 + $0x88] sm:$0x1]
    %49 = vset.pattern.permute.xlu0 0
    %50 = vperm.xlu0 %49, %v28
    %v51 = vpop.permute.xlu0 %50
    %v53 = vperm.slane %v29, 0
    %v54 = vmul.f32 %v51, %v53
    %55 = vset.pattern.permute.xlu0 1
    %56 = vperm.xlu0 %55, %v28
    %v57 = vpop.permute.xlu0 %56
    %v59 = vperm.slane %v29, 1
    %v60 = vmul.f32 %v57, %v59
    %v61 = vadd.f32 %v54, %v60
    %v62 = vperm.slane %v30, 0
    %v63 = vadd.f32 %v61, %v62
    %v64 = vmax.f32 %v63, 0.0
    %v65 = vperm.slane %v47, 0
    %66 = vmatpush.msra.mxu0 %v46
    %67 = vmatpush.msra.mxu0 %v45
    %68 = vmatpush.msra.mxu0 %v44
    %69 = vmatpush.msra.mxu0 %v43
    %70 = vmatpush.msra.mxu0 %v42
    %71 = vmatpush.msra.mxu0 %v41
    %72 = vmatpush.msra.mxu0 %v40
    %73 = vmatpush.msra.mxu0 %v39
    %74 = vmatpush.msra.mxu0 %v38
    %75 = vmatpush.msra.mxu0 %v37
    %76 = vmatpush.msra.mxu0 %v36
    %77 = vmatpush.msra.mxu0 %v35
    %78 = vmatpush.msra.mxu0 %v34
    %79 = vmatpush.msra.mxu0 %v33
    %80 = vmatpush.msra.mxu0 %v32
    %81 = vmatpush.msra.mxu0 %v31
    %82 = vmatmul.f32.gmra.mxu0 %v64
    %v83 = vpop.f32.mrf.mxu0
    %v84 = vadd.f32 %v65, %v83
    %85 = vdwg.mxu0
    %86 = vst [vmem:[#allocation5] sm:$0xff] %v84
    // Predicated region
    $region14: #{tpu_custom_call.1} parent=1 // pred_check
      _
    $region15: #{tpu_custom_call.1} parent=1 // pred_check_branch
      %88 = sbr.rel (0) target = $region17
    $region16: #{tpu_custom_call.1} parent=1 // pred_region
      %90 = vsyncadd [#allocation4], 0
      %s92 = sshll.u32 [#allocation5], 4
      %s93 = int_to_ptr.vmem [resolvable:$true] %s92
      %s94 = sshll.u32 %s2, 4
      %s95 = int_to_ptr.hbm [resolvable:$true] %s94
      %97 = dma.vmem_to_hbm [thread:$0]  %s93, 128, %s95, [#allocation4]
    $region17: #{tpu_custom_call.1} parent=1 // pred_fallthru
      _
    // Predicated region
    $region18: #{tpu_custom_call.1} parent=1 // pred_check
      _
    $region19: #{tpu_custom_call.1} parent=1 // pred_check_branch
      %99 = sbr.rel (0) target = $region21
    $region20: #{tpu_custom_call.1} parent=1 // pred_region
      %101 = dma.done [#allocation4], 128
    $region21: #{tpu_custom_call.1} parent=1 // pred_fallthru
      _
    %102 = vsyncpa [#allocation3], 1
    %103 = vsyncpa [#allocation4], 1

</llo_original>
